<compile_context>
chip_gen: v7x
topology: tpu7x:2x2x1
jax: 0.10.0
libtpu: 0.0.40
codegen_flags: <defaults>
</compile_context>

<pallas_src>
import functools

import jax
import jax.numpy as jnp
import numpy as np
from jax import lax
from jax.experimental import pallas as pl
from jax.experimental.pallas import tpu as pltpu

# lane indices of the packed scalar row emitted by the fused kernel
_LOSS, _TR_L1, _TR_L2, _TR_R1, _TR_R2, _MEAN_RATIO, _SUM_FIMS = range(7)
_ROW_LANES = 128
_EPS = float(np.finfo(np.float32).eps)

_VMEM_SPEC = pl.BlockSpec(memory_space=pltpu.MemorySpace.VMEM)


# ------------------------- single fused kernel -------------------------------

def _balance_kernel(x_ref, wl1_ref, wl2_ref, wr1_ref, wr2_ref, gumbel_ref,
                    out_ref, y_ref):
    """Forward + Gumbel-max sampling + CE + closed-form grads + traces.

    Outputs:
      out_ref: (1, 128) f32 lane-dense row
               [loss, tr(dWl1), tr(dWl2), tr(dWr1), tr(dWr2),
                mean_ratio, sum_of_fims, 0...]
      y_ref:   (B, 1) i32 sampled class labels.
    """
    x = x_ref[...]
    wl2 = wl2_ref[...]
    wr2 = wr2_ref[...]

    # ---- forward: two branches, summed logits (4 MXU matmuls) --------------
    hl = jnp.dot(x, wl1_ref[...], preferred_element_type=jnp.float32)
    hr = jnp.dot(x, wr1_ref[...], preferred_element_type=jnp.float32)
    logits = (jnp.dot(hl, wl2, preferred_element_type=jnp.float32)
              + jnp.dot(hr, wr2, preferred_element_type=jnp.float32))

    b, c = logits.shape
    inv_b = 1.0 / b

    # ---- Categorical(logits).sample() via Gumbel-max ------------------------
    z = logits + gumbel_ref[...]
    lane = lax.broadcasted_iota(jnp.int32, (b, c), 1)
    zmax = jnp.max(z, axis=-1, keepdims=True)
    # first-occurrence argmax (float min over lane indices of the maxima)
    idx_f = jnp.min(jnp.where(z == zmax, lane.astype(jnp.float32),
                              jnp.float32(c)),
                    axis=-1, keepdims=True)                 # (B, 1)
    y_i = idx_f.astype(jnp.int32)
    onehot = (lane == y_i).astype(jnp.float32)              # (B, C)
    y_ref[...] = y_i

    # ---- mean-reduced cross-entropy and g = dloss/dlogits -------------------
    m = jnp.max(logits, axis=-1, keepdims=True)
    ez = jnp.exp(logits - m)
    se = jnp.sum(ez, axis=-1, keepdims=True)
    lse = jnp.log(se) + m                                   # (B, 1)
    p = ez / se                                             # softmax
    nll = lse - jnp.sum(onehot * logits, axis=-1, keepdims=True)
    loss = jnp.sum(nll, axis=0, keepdims=True) * inv_b      # (1, 1)
    g = (p - onehot) * inv_b                                # (B, C)

    def sqsum(v):                                           # -> (1, 1)
        s = jnp.sum(v * v, axis=-1, keepdims=True)
        return jnp.sum(s, axis=0, keepdims=True)

    contract_batch = (((0,), (0,)), ((), ()))   # contract over the batch axis
    contract_last = (((1,), (1,)), ((), ()))    # contract over the last axis

    def branch_traces(h, w2):
        # dW2 = h^T g, dh = g W2^T, dW1 = x^T dh — no materialized transposes.
        dw2 = lax.dot_general(h, g, contract_batch,
                              preferred_element_type=jnp.float32)   # [H, C]
        dh = lax.dot_general(g, w2, contract_last,
                             preferred_element_type=jnp.float32)    # [B, H]
        dw1 = lax.dot_general(x, dh, contract_batch,
                              preferred_element_type=jnp.float32)   # [D, H]
        return sqsum(dw1), sqsum(dw2)

    tr_l1, tr_l2 = branch_traces(hl, wl2)
    tr_r1, tr_r2 = branch_traces(hr, wr2)

    # ---- final reductions (match the torch module) ---------------------------
    overall_l = tr_l1 + tr_l2
    overall_r = tr_r1 + tr_r2
    mean_ratio = (overall_l / (overall_r + _EPS)
                  + overall_r / (overall_l + _EPS)) * 0.5
    sum_of_fims = overall_l + overall_r

    # ---- pack the 7 scalars into one lane-dense output row -------------------
    out_lane = lax.broadcasted_iota(jnp.int32, (1, _ROW_LANES), 1)

    def place(val11, idx):
        return jnp.where(out_lane == idx, val11, jnp.float32(0.0))

    out_ref[...] = (place(loss, _LOSS)
                    + place(tr_l1, _TR_L1) + place(tr_l2, _TR_L2)
                    + place(tr_r1, _TR_R1) + place(tr_r2, _TR_R2)
                    + place(mean_ratio, _MEAN_RATIO)
                    + place(sum_of_fims, _SUM_FIMS))


def fused_balance(x, wl1, wl2, wr1, wr2, gumbel):
    B = x.shape[0]
    return pl.pallas_call(
        _balance_kernel,
        out_shape=(jax.ShapeDtypeStruct((1, _ROW_LANES), jnp.float32),
                   jax.ShapeDtypeStruct((B, 1), jnp.int32)),
        in_specs=[_VMEM_SPEC] * 6,
        out_specs=(_VMEM_SPEC, _VMEM_SPEC),
    )(x, wl1, wl2, wr1, wr2, gumbel)


# ------------------------------ BalancePenaly -------------------------------

@functools.partial(jax.jit, static_argnames=("num_classes",))
def balance_penalty(params, x, key, num_classes):
    """JAX/Pallas equivalent of BalancePenaly.forward.

    Returns (mean_ratio, sum_of_fims, traces_vec, loss, y_sampled), all as
    device values (no host syncs inside).
    """
    # Gumbel noise is independent of the logits, so it can be drawn outside
    # the kernel; argmax(logits + gumbel) inside the kernel is exactly the
    # Categorical(logits=y_pred).sample() semantics.
    gumbel = jax.random.gumbel(key, (x.shape[0], num_classes),
                               dtype=jnp.float32)

    # TODO(synk): generic torch.autograd.grad over an arbitrary user model has
    # no clean Pallas equivalent; gradients are derived in closed form for the
    # synthetic two-branch model and fused into the single kernel.
    row, y = fused_balance(
        x,
        params["left_branch.fc1.weight"], params["left_branch.fc2.weight"],
        params["right_branch.fc1.weight"], params["right_branch.fc2.weight"],
        gumbel)

    y_sampled = y[:, 0]
    loss = row[0, _LOSS]
    traces_vec = row[0, _TR_L1:_TR_R2 + 1]      # [trL1, trL2, trR1, trR2]
    mean_ratio = row[0, _MEAN_RATIO]
    sum_of_fims = row[0, _SUM_FIMS]
    return mean_ratio, sum_of_fims, traces_vec, loss, y_sampled


# -------------------------------- reference ---------------------------------

def _ref_loss(params, x, y):
    hl = x @ params["left_branch.fc1.weight"]
    yl = hl @ params["left_branch.fc2.weight"]
    hr = x @ params["right_branch.fc1.weight"]
    yr = hr @ params["right_branch.fc2.weight"]
    logits = yl + yr
    lse = jax.scipy.special.logsumexp(logits, axis=-1)
    picked = jnp.take_along_axis(logits, y[:, None], axis=-1)[:, 0]
    return jnp.mean(lse - picked)


# ---------------------------------- main -------------------------------------

if __name__ == "__main__":
    B, D, H, C = 8, 32, 32, 16   # batch, in-features, hidden, num_classes

    root = jax.random.PRNGKey(0)
    k_x, k1, k2, k3, k4, k_sample = jax.random.split(root, 6)

    x = jax.random.normal(k_x, (B, D), dtype=jnp.float32)
    params = {
        "left_branch.fc1.weight":  0.20 * jax.random.normal(k1, (D, H), jnp.float32),
        "left_branch.fc2.weight":  0.20 * jax.random.normal(k2, (H, C), jnp.float32),
        "right_branch.fc1.weight": 0.10 * jax.random.normal(k3, (D, H), jnp.float32),
        "right_branch.fc2.weight": 0.10 * jax.random.normal(k4, (H, C), jnp.float32),
    }

    out = balance_penalty(params, x, k_sample, C)
    out = jax.block_until_ready(out)             # single host sync
    mean_ratio, sum_of_fims, traces_vec, loss, y_sampled = out

    trace_names = ["left_branch.fc1.weight", "left_branch.fc2.weight",
                   "right_branch.fc1.weight", "right_branch.fc2.weight"]
    traces = {f"balance_penalty/{n}": float(t)
              for n, t in zip(trace_names, np.asarray(traces_vec))}

    # -- verify against a pure-JAX autograd reference (same sampled labels) --
    y_ref_labels = jnp.asarray(np.asarray(y_sampled), dtype=jnp.int32)
    assert int(jnp.min(y_ref_labels)) >= 0 and int(jnp.max(y_ref_labels)) < C

    grads_ref = jax.grad(_ref_loss)(params, x, y_ref_labels)
    tr = {n: float(jnp.sum(g * g)) for n, g in grads_ref.items()}
    L_ref = tr["left_branch.fc1.weight"] + tr["left_branch.fc2.weight"]
    R_ref = tr["right_branch.fc1.weight"] + tr["right_branch.fc2.weight"]
    mr_ref = (L_ref / (R_ref + _EPS) + R_ref / (L_ref + _EPS)) / 2.0
    loss_ref = float(_ref_loss(params, x, y_ref_labels))

    np.testing.assert_allclose(float(sum_of_fims), L_ref + R_ref,
                               rtol=5e-2, atol=1e-6)
    np.testing.assert_allclose(float(mean_ratio), mr_ref, rtol=5e-2, atol=1e-6)
    np.testing.assert_allclose(float(loss), loss_ref, rtol=5e-2, atol=1e-6)
    for n in grads_ref:
        np.testing.assert_allclose(traces[f"balance_penalty/{n}"], tr[n],
                                   rtol=5e-2, atol=1e-7)

    print("KERNEL_OK")
</pallas_src>

<mosaic_0001>
module attributes {stable_mosaic.version = 11 : i64} {
  func.func @_balance_kernel(%arg0: memref<8x32xf32, #tpu.memory_space<vmem>>, %arg1: memref<32x32xf32, #tpu.memory_space<vmem>>, %arg2: memref<32x16xf32, #tpu.memory_space<vmem>>, %arg3: memref<32x32xf32, #tpu.memory_space<vmem>>, %arg4: memref<32x16xf32, #tpu.memory_space<vmem>>, %arg5: memref<8x16xf32, #tpu.memory_space<vmem>>, %arg6: memref<1x128xf32, #tpu.memory_space<vmem>>, %arg7: memref<8x1xi32, #tpu.memory_space<vmem>>) attributes {dimension_semantics = [], scalar_prefetch = 0 : i64, scratch_operands = 0 : i64, tpu.core_type = #tpu.core_type<tc>} {
    %c0 = arith.constant 0 : index
    %c0_0 = arith.constant 0 : index
    %0 = vector.load %arg0[%c0, %c0_0] : memref<8x32xf32, #tpu.memory_space<vmem>>, vector<8x32xf32>
    %c0_1 = arith.constant 0 : index
    %c0_2 = arith.constant 0 : index
    %1 = vector.load %arg2[%c0_1, %c0_2] : memref<32x16xf32, #tpu.memory_space<vmem>>, vector<32x16xf32>
    %c0_3 = arith.constant 0 : index
    %c0_4 = arith.constant 0 : index
    %2 = vector.load %arg4[%c0_3, %c0_4] : memref<32x16xf32, #tpu.memory_space<vmem>>, vector<32x16xf32>
    %c0_5 = arith.constant 0 : index
    %c0_6 = arith.constant 0 : index
    %3 = vector.load %arg1[%c0_5, %c0_6] : memref<32x32xf32, #tpu.memory_space<vmem>>, vector<32x32xf32>
    %cst = arith.constant dense<0.000000e+00> : vector<8x32xf32>
    %4 = tpu.matmul %0, %3, %cst {dimension_numbers = #tpu.dot_dimension_numbers<[1], [0], [0], [1], [0, 0, 1, 1], [], []>} : vector<8x32xf32>, vector<32x32xf32>, vector<8x32xf32> -> vector<8x32xf32>
    %c0_7 = arith.constant 0 : index
    %c0_8 = arith.constant 0 : index
    %5 = vector.load %arg3[%c0_7, %c0_8] : memref<32x32xf32, #tpu.memory_space<vmem>>, vector<32x32xf32>
    %cst_9 = arith.constant dense<0.000000e+00> : vector<8x32xf32>
    %6 = tpu.matmul %0, %5, %cst_9 {dimension_numbers = #tpu.dot_dimension_numbers<[1], [0], [0], [1], [0, 0, 1, 1], [], []>} : vector<8x32xf32>, vector<32x32xf32>, vector<8x32xf32> -> vector<8x32xf32>
    %cst_10 = arith.constant dense<0.000000e+00> : vector<8x16xf32>
    %7 = tpu.matmul %4, %1, %cst_10 {dimension_numbers = #tpu.dot_dimension_numbers<[1], [0], [0], [1], [0, 0, 1, 1], [], []>} : vector<8x32xf32>, vector<32x16xf32>, vector<8x16xf32> -> vector<8x16xf32>
    %cst_11 = arith.constant dense<0.000000e+00> : vector<8x16xf32>
    %8 = tpu.matmul %6, %2, %cst_11 {dimension_numbers = #tpu.dot_dimension_numbers<[1], [0], [0], [1], [0, 0, 1, 1], [], []>} : vector<8x32xf32>, vector<32x16xf32>, vector<8x16xf32> -> vector<8x16xf32>
    %9 = arith.addf %7, %8 : vector<8x16xf32>
    %c0_12 = arith.constant 0 : index
    %c0_13 = arith.constant 0 : index
    %10 = vector.load %arg5[%c0_12, %c0_13] : memref<8x16xf32, #tpu.memory_space<vmem>>, vector<8x16xf32>
    %11 = arith.addf %9, %10 : vector<8x16xf32>
    %12 = tpu.iota {dimensions = array<i32: 1>} : vector<8x16xi32>
    %cst_14 = arith.constant dense<0xFF800000> : vector<8xf32>
    %13 = vector.multi_reduction <maximumf>, %11, %cst_14 [1] : vector<8x16xf32> to vector<8xf32>
    %14 = vector.shape_cast %13 : vector<8xf32> to vector<8x1xf32>
    %15 = vector.broadcast %14 : vector<8x1xf32> to vector<8x16xf32>
    %16 = arith.cmpf oeq, %11, %15 : vector<8x16xf32>
    %17 = arith.sitofp %12 : vector<8x16xi32> to vector<8x16xf32>
    %cst_15 = arith.constant 1.600000e+01 : f32
    %18 = vector.broadcast %cst_15 : f32 to vector<8x16xf32>
    %19 = arith.select %16, %17, %18 : vector<8x16xi1>, vector<8x16xf32>
    %cst_16 = arith.constant dense<0x7F800000> : vector<8xf32>
    %20 = vector.multi_reduction <minimumf>, %19, %cst_16 [1] : vector<8x16xf32> to vector<8xf32>
    %21 = vector.shape_cast %20 : vector<8xf32> to vector<8x1xf32>
    %22 = arith.fptosi %21 : vector<8x1xf32> to vector<8x1xi32>
    %23 = vector.broadcast %22 : vector<8x1xi32> to vector<8x16xi32>
    %24 = arith.cmpi eq, %12, %23 : vector<8x16xi32>
    %25 = arith.extui %24 : vector<8x16xi1> to vector<8x16xi32>
    %26 = arith.sitofp %25 : vector<8x16xi32> to vector<8x16xf32>
    %c0_17 = arith.constant 0 : index
    %c0_18 = arith.constant 0 : index
    %27 = vector.load %arg7[%c0_17, %c0_18] : memref<8x1xi32, #tpu.memory_space<vmem>>, vector<8x1xi32>
    tpu.vector_store %arg7[%c0_17, %c0_18], %22 {strides = array<i32>} : memref<8x1xi32, #tpu.memory_space<vmem>>, vector<8x1xi32>,
    %cst_19 = arith.constant dense<0xFF800000> : vector<8xf32>
    %28 = vector.multi_reduction <maximumf>, %9, %cst_19 [1] : vector<8x16xf32> to vector<8xf32>
    %29 = vector.shape_cast %28 : vector<8xf32> to vector<8x1xf32>
    %30 = vector.broadcast %29 : vector<8x1xf32> to vector<8x16xf32>
    %31 = arith.subf %9, %30 : vector<8x16xf32>
    %32 = math.exp %31 : vector<8x16xf32>
    %cst_20 = arith.constant dense<0.000000e+00> : vector<8xf32>
    %33 = vector.multi_reduction <add>, %32, %cst_20 [1] : vector<8x16xf32> to vector<8xf32>
    %34 = vector.shape_cast %33 : vector<8xf32> to vector<8x1xf32>
    %35 = math.log %34 : vector<8x1xf32>
    %36 = arith.addf %35, %29 : vector<8x1xf32>
    %37 = vector.broadcast %34 : vector<8x1xf32> to vector<8x16xf32>
    %38 = arith.divf %32, %37 : vector<8x16xf32>
    %39 = arith.mulf %26, %9 : vector<8x16xf32>
    %cst_21 = arith.constant dense<0.000000e+00> : vector<8xf32>
    %40 = vector.multi_reduction <add>, %39, %cst_21 [1] : vector<8x16xf32> to vector<8xf32>
    %41 = vector.shape_cast %40 : vector<8xf32> to vector<8x1xf32>
    %42 = arith.subf %36, %41 : vector<8x1xf32>
    %cst_22 = arith.constant dense<0.000000e+00> : vector<1xf32>
    %43 = vector.multi_reduction <add>, %42, %cst_22 [0] : vector<8x1xf32> to vector<1xf32>
    %44 = vector.shape_cast %43 : vector<1xf32> to vector<1x1xf32>
    %cst_23 = arith.constant 1.250000e-01 : f32
    %45 = vector.broadcast %cst_23 : f32 to vector<1x1xf32>
    %46 = arith.mulf %44, %45 : vector<1x1xf32>
    %47 = arith.subf %38, %26 : vector<8x16xf32>
    %cst_24 = arith.constant 1.250000e-01 : f32
    %48 = vector.broadcast %cst_24 : f32 to vector<8x16xf32>
    %49 = arith.mulf %47, %48 : vector<8x16xf32>
    %cst_25 = arith.constant dense<0.000000e+00> : vector<32x16xf32>
    %50 = tpu.matmul %4, %49, %cst_25 {dimension_numbers = #tpu.dot_dimension_numbers<[0], [0], [1], [1], [0, 1, 1, 1], [], []>} : vector<8x32xf32>, vector<8x16xf32>, vector<32x16xf32> -> vector<32x16xf32>
    %cst_26 = arith.constant dense<0.000000e+00> : vector<8x32xf32>
    %51 = tpu.matmul %49, %1, %cst_26 {dimension_numbers = #tpu.dot_dimension_numbers<[1], [1], [0], [0], [0, 0, 1, 0], [], []>} : vector<8x16xf32>, vector<32x16xf32>, vector<8x32xf32> -> vector<8x32xf32>
    %cst_27 = arith.constant dense<0.000000e+00> : vector<32x32xf32>
    %52 = tpu.matmul %0, %51, %cst_27 {dimension_numbers = #tpu.dot_dimension_numbers<[0], [0], [1], [1], [0, 1, 1, 1], [], []>} : vector<8x32xf32>, vector<8x32xf32>, vector<32x32xf32> -> vector<32x32xf32>
    %53 = arith.mulf %52, %52 : vector<32x32xf32>
    %cst_28 = arith.constant dense<0.000000e+00> : vector<32xf32>
    %54 = vector.multi_reduction <add>, %53, %cst_28 [1] : vector<32x32xf32> to vector<32xf32>
    %55 = vector.shape_cast %54 : vector<32xf32> to vector<32x1xf32>
    %cst_29 = arith.constant dense<0.000000e+00> : vector<1xf32>
    %56 = vector.multi_reduction <add>, %55, %cst_29 [0] : vector<32x1xf32> to vector<1xf32>
    %57 = vector.shape_cast %56 : vector<1xf32> to vector<1x1xf32>
    %58 = arith.mulf %50, %50 : vector<32x16xf32>
    %cst_30 = arith.constant dense<0.000000e+00> : vector<32xf32>
    %59 = vector.multi_reduction <add>, %58, %cst_30 [1] : vector<32x16xf32> to vector<32xf32>
    %60 = vector.shape_cast %59 : vector<32xf32> to vector<32x1xf32>
    %cst_31 = arith.constant dense<0.000000e+00> : vector<1xf32>
    %61 = vector.multi_reduction <add>, %60, %cst_31 [0] : vector<32x1xf32> to vector<1xf32>
    %62 = vector.shape_cast %61 : vector<1xf32> to vector<1x1xf32>
    %cst_32 = arith.constant dense<0.000000e+00> : vector<32x16xf32>
    %63 = tpu.matmul %6, %49, %cst_32 {dimension_numbers = #tpu.dot_dimension_numbers<[0], [0], [1], [1], [0, 1, 1, 1], [], []>} : vector<8x32xf32>, vector<8x16xf32>, vector<32x16xf32> -> vector<32x16xf32>
    %cst_33 = arith.constant dense<0.000000e+00> : vector<8x32xf32>
    %64 = tpu.matmul %49, %2, %cst_33 {dimension_numbers = #tpu.dot_dimension_numbers<[1], [1], [0], [0], [0, 0, 1, 0], [], []>} : vector<8x16xf32>, vector<32x16xf32>, vector<8x32xf32> -> vector<8x32xf32>
    %cst_34 = arith.constant dense<0.000000e+00> : vector<32x32xf32>
    %65 = tpu.matmul %0, %64, %cst_34 {dimension_numbers = #tpu.dot_dimension_numbers<[0], [0], [1], [1], [0, 1, 1, 1], [], []>} : vector<8x32xf32>, vector<8x32xf32>, vector<32x32xf32> -> vector<32x32xf32>
    %66 = arith.mulf %65, %65 : vector<32x32xf32>
    %cst_35 = arith.constant dense<0.000000e+00> : vector<32xf32>
    %67 = vector.multi_reduction <add>, %66, %cst_35 [1] : vector<32x32xf32> to vector<32xf32>
    %68 = vector.shape_cast %67 : vector<32xf32> to vector<32x1xf32>
    %cst_36 = arith.constant dense<0.000000e+00> : vector<1xf32>
    %69 = vector.multi_reduction <add>, %68, %cst_36 [0] : vector<32x1xf32> to vector<1xf32>
    %70 = vector.shape_cast %69 : vector<1xf32> to vector<1x1xf32>
    %71 = arith.mulf %63, %63 : vector<32x16xf32>
    %cst_37 = arith.constant dense<0.000000e+00> : vector<32xf32>
    %72 = vector.multi_reduction <add>, %71, %cst_37 [1] : vector<32x16xf32> to vector<32xf32>
    %73 = vector.shape_cast %72 : vector<32xf32> to vector<32x1xf32>
    %cst_38 = arith.constant dense<0.000000e+00> : vector<1xf32>
    %74 = vector.multi_reduction <add>, %73, %cst_38 [0] : vector<32x1xf32> to vector<1xf32>
    %75 = vector.shape_cast %74 : vector<1xf32> to vector<1x1xf32>
    %76 = arith.addf %57, %62 : vector<1x1xf32>
    %77 = arith.addf %70, %75 : vector<1x1xf32>
    %cst_39 = arith.constant 1.1920929E-7 : f32
    %78 = vector.broadcast %cst_39 : f32 to vector<1x1xf32>
    %79 = arith.addf %77, %78 : vector<1x1xf32>
    %80 = arith.divf %76, %79 : vector<1x1xf32>
    %cst_40 = arith.constant 1.1920929E-7 : f32
    %81 = vector.broadcast %cst_40 : f32 to vector<1x1xf32>
    %82 = arith.addf %76, %81 : vector<1x1xf32>
    %83 = arith.divf %77, %82 : vector<1x1xf32>
    %84 = arith.addf %80, %83 : vector<1x1xf32>
    %cst_41 = arith.constant 5.000000e-01 : f32
    %85 = vector.broadcast %cst_41 : f32 to vector<1x1xf32>
    %86 = arith.mulf %84, %85 : vector<1x1xf32>
    %87 = arith.addf %76, %77 : vector<1x1xf32>
    %88 = tpu.iota {dimensions = array<i32: 1>} : vector<1x128xi32>
    %c0_i32 = arith.constant 0 : i32
    %89 = vector.broadcast %c0_i32 : i32 to vector<1x128xi32>
    %90 = arith.cmpi eq, %88, %89 : vector<1x128xi32>
    %cst_42 = arith.constant 0.000000e+00 : f32
    %91 = vector.shape_cast %46 : vector<1x1xf32> to vector<1x1xf32>
    %92 = vector.broadcast %91 : vector<1x1xf32> to vector<1x128xf32>
    %93 = vector.broadcast %cst_42 : f32 to vector<1x128xf32>
    %94 = arith.select %90, %92, %93 : vector<1x128xi1>, vector<1x128xf32>
    %c1_i32 = arith.constant 1 : i32
    %95 = vector.broadcast %c1_i32 : i32 to vector<1x128xi32>
    %96 = arith.cmpi eq, %88, %95 : vector<1x128xi32>
    %cst_43 = arith.constant 0.000000e+00 : f32
    %97 = vector.shape_cast %57 : vector<1x1xf32> to vector<1x1xf32>
    %98 = vector.broadcast %97 : vector<1x1xf32> to vector<1x128xf32>
    %99 = vector.broadcast %cst_43 : f32 to vector<1x128xf32>
    %100 = arith.select %96, %98, %99 : vector<1x128xi1>, vector<1x128xf32>
    %101 = arith.addf %94, %100 : vector<1x128xf32>
    %c2_i32 = arith.constant 2 : i32
    %102 = vector.broadcast %c2_i32 : i32 to vector<1x128xi32>
    %103 = arith.cmpi eq, %88, %102 : vector<1x128xi32>
    %cst_44 = arith.constant 0.000000e+00 : f32
    %104 = vector.shape_cast %62 : vector<1x1xf32> to vector<1x1xf32>
    %105 = vector.broadcast %104 : vector<1x1xf32> to vector<1x128xf32>
    %106 = vector.broadcast %cst_44 : f32 to vector<1x128xf32>
    %107 = arith.select %103, %105, %106 : vector<1x128xi1>, vector<1x128xf32>
    %108 = arith.addf %101, %107 : vector<1x128xf32>
    %c3_i32 = arith.constant 3 : i32
    %109 = vector.broadcast %c3_i32 : i32 to vector<1x128xi32>
    %110 = arith.cmpi eq, %88, %109 : vector<1x128xi32>
    %cst_45 = arith.constant 0.000000e+00 : f32
    %111 = vector.shape_cast %70 : vector<1x1xf32> to vector<1x1xf32>
    %112 = vector.broadcast %111 : vector<1x1xf32> to vector<1x128xf32>
    %113 = vector.broadcast %cst_45 : f32 to vector<1x128xf32>
    %114 = arith.select %110, %112, %113 : vector<1x128xi1>, vector<1x128xf32>
    %115 = arith.addf %108, %114 : vector<1x128xf32>
    %c4_i32 = arith.constant 4 : i32
    %116 = vector.broadcast %c4_i32 : i32 to vector<1x128xi32>
    %117 = arith.cmpi eq, %88, %116 : vector<1x128xi32>
    %cst_46 = arith.constant 0.000000e+00 : f32
    %118 = vector.shape_cast %75 : vector<1x1xf32> to vector<1x1xf32>
    %119 = vector.broadcast %118 : vector<1x1xf32> to vector<1x128xf32>
    %120 = vector.broadcast %cst_46 : f32 to vector<1x128xf32>
    %121 = arith.select %117, %119, %120 : vector<1x128xi1>, vector<1x128xf32>
    %122 = arith.addf %115, %121 : vector<1x128xf32>
    %c5_i32 = arith.constant 5 : i32
    %123 = vector.broadcast %c5_i32 : i32 to vector<1x128xi32>
    %124 = arith.cmpi eq, %88, %123 : vector<1x128xi32>
    %cst_47 = arith.constant 0.000000e+00 : f32
    %125 = vector.shape_cast %86 : vector<1x1xf32> to vector<1x1xf32>
    %126 = vector.broadcast %125 : vector<1x1xf32> to vector<1x128xf32>
    %127 = vector.broadcast %cst_47 : f32 to vector<1x128xf32>
    %128 = arith.select %124, %126, %127 : vector<1x128xi1>, vector<1x128xf32>
    %129 = arith.addf %122, %128 : vector<1x128xf32>
    %c6_i32 = arith.constant 6 : i32
    %130 = vector.broadcast %c6_i32 : i32 to vector<1x128xi32>
    %131 = arith.cmpi eq, %88, %130 : vector<1x128xi32>
    %cst_48 = arith.constant 0.000000e+00 : f32
    %132 = vector.shape_cast %87 : vector<1x1xf32> to vector<1x1xf32>
    %133 = vector.broadcast %132 : vector<1x1xf32> to vector<1x128xf32>
    %134 = vector.broadcast %cst_48 : f32 to vector<1x128xf32>
    %135 = arith.select %131, %133, %134 : vector<1x128xi1>, vector<1x128xf32>
    %136 = arith.addf %129, %135 : vector<1x128xf32>
    %c0_49 = arith.constant 0 : index
    %c0_50 = arith.constant 0 : index
    %137 = vector.load %arg6[%c0_49, %c0_50] : memref<1x128xf32, #tpu.memory_space<vmem>>, vector<1x128xf32>
    tpu.vector_store %arg6[%c0_49, %c0_50], %136 {strides = array<i32>} : memref<1x128xf32, #tpu.memory_space<vmem>>, vector<1x128xf32>,
    return
  }
}

</mosaic_0001>

<llo_original>
// kernel: balance_penalty.1
$region0: #{balance_penalty.1}
  #allocation0 [shape = 'u32[]', space=smem, size = 0x4, offset = 0x4, fixed_abs, tag = 'smem constant byte address 0x4 - core index']
  #allocation1 [shape = 'u32[144,128]{1,0:T(1,128)}', space=vmem, size = 0x12000, scoped, tag = 'internal scratch']
  %s0 = inlined_call_operand.vmem [shape: f32[8,32], index: 0, kind: input, shape index: {}]
  %s1 = inlined_call_operand.vmem [shape: f32[32,32], index: 1, kind: input, shape index: {}]
  %s2 = inlined_call_operand.vmem [shape: f32[32,16], index: 2, kind: input, shape index: {}]
  %s3 = inlined_call_operand.vmem [shape: f32[32,32], index: 3, kind: input, shape index: {}]
  %s4 = inlined_call_operand.vmem [shape: f32[32,16], index: 4, kind: input, shape index: {}]
  %s5 = inlined_call_operand.vmem [shape: f32[8,16], index: 5, kind: input, shape index: {}]
  %s6 = inlined_call_operand.vmem [shape: f32[1,128], index: 6, kind: output, shape index: {0}]
  %s7 = inlined_call_operand.vmem [shape: s32[8,1], index: 7, kind: output, shape index: {1}]
  %8 = xla_tuple %s6, %s7
  %s9 = sld [smem:[#allocation0]]
  $region42: #{balance_penalty.1} parent=0
    _
  %s11 = ssub.s32 1, %s9
  %s12 = scalar_select 0, %s11, %s9
  // Predicated region
  $region2: #{balance_penalty.1} parent=0 // pred_check
    _
  $region3: #{balance_penalty.1} parent=0 // pred_check_branch
    %14 = sbr.rel (0) target = $region5
  $region4: #{balance_penalty.1} parent=0 // pred_region
    _
  $region5: #{balance_penalty.1} parent=0 // pred_fallthru
    _
  // Predicated region
  $region6: #{balance_penalty.1} parent=0 // pred_check
    _
  $region7: #{balance_penalty.1} parent=0 // pred_check_branch
    %16 = sbr.rel (0) target = $region9
  $region8: #{balance_penalty.1} parent=0 // pred_region
    _
  $region9: #{balance_penalty.1} parent=0 // pred_fallthru
    _
  // Predicated region
  $region10: #{balance_penalty.1} parent=0 // pred_check
    _
  $region11: #{balance_penalty.1} parent=0 // pred_check_branch
    %18 = sbr.rel (0) target = $region13
  $region12: #{balance_penalty.1} parent=0 // pred_region
    _
  $region13: #{balance_penalty.1} parent=0 // pred_fallthru
    _
  // Predicated region
  $region14: #{balance_penalty.1} parent=0 // pred_check
    _
  $region15: #{balance_penalty.1} parent=0 // pred_check_branch
    %20 = sbr.rel (0) target = $region17
  $region16: #{balance_penalty.1} parent=0 // pred_region
    _
  $region17: #{balance_penalty.1} parent=0 // pred_fallthru
    _
  // Predicated region
  $region18: #{balance_penalty.1} parent=0 // pred_check
    _
  $region19: #{balance_penalty.1} parent=0 // pred_check_branch
    %22 = sbr.rel (0) target = $region21
  $region20: #{balance_penalty.1} parent=0 // pred_region
    _
  $region21: #{balance_penalty.1} parent=0 // pred_fallthru
    _
  // Predicated region
  $region22: #{balance_penalty.1} parent=0 // pred_check
    _
  $region23: #{balance_penalty.1} parent=0 // pred_check_branch
    %24 = sbr.rel (0) target = $region25
  $region24: #{balance_penalty.1} parent=0 // pred_region
    _
  $region25: #{balance_penalty.1} parent=0 // pred_fallthru
    _
  %v25 = vld [vmem:[%s0] sm:$0xff]
  %v26 = vld [vmem:[%s2] sm:$0xff]
  %v27 = vld [vmem:[%s2 + $0x8] sm:$0xff]
  %v28 = vld [vmem:[%s2 + $0x10] sm:$0xff]
  %v29 = vld [vmem:[%s2 + $0x18] sm:$0xff]
  %v30 = vld [vmem:[%s4] sm:$0xff]
  %v31 = vld [vmem:[%s4 + $0x8] sm:$0xff]
  %v32 = vld [vmem:[%s4 + $0x10] sm:$0xff]
  %v33 = vld [vmem:[%s4 + $0x18] sm:$0xff]
  %v34 = vld [vmem:[%s1] sm:$0xff]
  %v35 = vld [vmem:[%s1 + $0x8] sm:$0xff]
  %v36 = vld [vmem:[%s1 + $0x10] sm:$0xff]
  %v37 = vld [vmem:[%s1 + $0x18] sm:$0xff]
  %vm38 = vcmask 261120
  %v40 = vsel %vm38, %v25, 0
  %42 = vmatprep.subr.mxu0 0.0
  %43 = vmatpush1.msra.mxu0 %v34
  %44 = vmatprep.subr.mxu0 0.0
  %45 = vmatpush1.msra.mxu0 %v35
  %46 = vmatprep.subr.mxu0 0.0
  %47 = vmatpush1.msra.mxu0 %v36
  %48 = vmatprep.subr.mxu0 0.0
  %49 = vmatpush1.msra.mxu0 %v37
  %50 = vmatprep.subr.mxu0 0.0
  %51 = vmatpush1.msra.mxu0 0.0
  %52 = vmatprep.subr.mxu0 0.0
  %53 = vmatpush1.msra.mxu0 0.0
  %54 = vmatprep.subr.mxu0 0.0
  %55 = vmatpush1.msra.mxu0 0.0
  %56 = vmatprep.subr.mxu0 0.0
  %57 = vmatpush1.msra.mxu0 0.0
  %58 = vmatprep.subr.mxu0 0.0
  %59 = vmatpush1.msra.mxu0 0.0
  %60 = vmatprep.subr.mxu0 0.0
  %61 = vmatpush1.msra.mxu0 0.0
  %62 = vmatprep.subr.mxu0 0.0
  %63 = vmatpush1.msra.mxu0 0.0
  %64 = vmatprep.subr.mxu0 0.0
  %65 = vmatpush1.msra.mxu0 0.0
  %66 = vmatprep.subr.mxu0 0.0
  %67 = vmatpush1.msra.mxu0 0.0
  %68 = vmatprep.subr.mxu0 0.0
  %69 = vmatpush1.msra.mxu0 0.0
  %70 = vmatprep.subr.mxu0 0.0
  %71 = vmatpush1.msra.mxu0 0.0
  %72 = vmatprep.subr.mxu0 0.0
  %73 = vmatpush1.msra.mxu0 0.0
  %74 = vmatprep.subr.mxu0 0.0
  %75 = vmatpush1.msra.mxu0 0.0
  %76 = vmatprep.subr.mxu0 0.0
  %77 = vmatpush1.msra.mxu0 0.0
  %78 = vmatprep.subr.mxu0 0.0
  %79 = vmatpush1.msra.mxu0 0.0
  %80 = vmatprep.subr.mxu0 0.0
  %81 = vmatpush1.msra.mxu0 0.0
  %82 = vmatprep.subr.mxu0 0.0
  %83 = vmatpush1.msra.mxu0 0.0
  %84 = vmatprep.subr.mxu0 0.0
  %85 = vmatpush1.msra.mxu0 0.0
  %86 = vmatprep.subr.mxu0 0.0
  %87 = vmatpush1.msra.mxu0 0.0
  %88 = vmatprep.subr.mxu0 0.0
  %89 = vmatpush1.msra.mxu0 0.0
  %90 = vmatprep.subr.mxu0 0.0
  %91 = vmatpush1.msra.mxu0 0.0
  %92 = vmatprep.subr.mxu0 0.0
  %93 = vmatpush1.msra.mxu0 0.0
  %94 = vmatprep.subr.mxu0 0.0
  %95 = vmatpush1.msra.mxu0 0.0
  %96 = vmatprep.subr.mxu0 0.0
  %97 = vmatpush1.msra.mxu0 0.0
  %98 = vmatprep.subr.mxu0 0.0
  %99 = vmatpush1.msra.mxu0 0.0
  %100 = vmatprep.subr.mxu0 0.0
  %101 = vmatpush1.msra.mxu0 0.0
  %102 = vmatprep.subr.mxu0 0.0
  %103 = vmatpush1.msra.mxu0 0.0
  %104 = vmatprep.subr.mxu0 0.0
  %105 = vmatpush1.msra.mxu0 0.0
  %106 = vmatprep.mubr.f32.mxu0 0.0
  %107 = vmatmul.mubr.f32.gmra.mrb[0].mxu0 %v40
  %v108 = vpop.f32.mrb[0].mxu0
  %v109 = vadd.f32 0.0, %v108
  %v110 = vpop.f32.mrb[0].mxu0
  %111 = vdwg.mxu0
  %v112 = vld [vmem:[%s3] sm:$0xff]
  %v113 = vld [vmem:[%s3 + $0x8] sm:$0xff]
  %v114 = vld [vmem:[%s3 + $0x10] sm:$0xff]
  %v115 = vld [vmem:[%s3 + $0x18] sm:$0xff]
  %116 = vmatprep.subr.mxu0 0.0
  %117 = vmatpush1.msra.mxu0 %v112
  %118 = vmatprep.subr.mxu0 0.0
  %119 = vmatpush1.msra.mxu0 %v113
  %120 = vmatprep.subr.mxu0 0.0
  %121 = vmatpush1.msra.mxu0 %v114
  %122 = vmatprep.subr.mxu0 0.0
  %123 = vmatpush1.msra.mxu0 %v115
  %124 = vmatprep.subr.mxu0 0.0
  %125 = vmatpush1.msra.mxu0 0.0
  %126 = vmatprep.subr.mxu0 0.0
  %127 = vmatpush1.msra.mxu0 0.0
  %128 = vmatprep.subr.mxu0 0.0
  %129 = vmatpush1.msra.mxu0 0.0
  %130 = vmatprep.subr.mxu0 0.0
  %131 = vmatpush1.msra.mxu0 0.0
  %132 = vmatprep.subr.mxu0 0.0
  %133 = vmatpush1.msra.mxu0 0.0
  %134 = vmatprep.subr.mxu0 0.0
  %135 = vmatpush1.msra.mxu0 0.0
  %136 = vmatprep.subr.mxu0 0.0
  %137 = vmatpush1.msra.mxu0 0.0
  %138 = vmatprep.subr.mxu0 0.0
  %139 = vmatpush1.msra.mxu0 0.0
  %140 = vmatprep.subr.mxu0 0.0
  %141 = vmatpush1.msra.mxu0 0.0
  %142 = vmatprep.subr.mxu0 0.0
  %143 = vmatpush1.msra.mxu0 0.0
  %144 = vmatprep.subr.mxu0 0.0
  %145 = vmatpush1.msra.mxu0 0.0
  %146 = vmatprep.subr.mxu0 0.0
  %147 = vmatpush1.msra.mxu0 0.0
  %148 = vmatprep.subr.mxu0 0.0
  %149 = vmatpush1.msra.mxu0 0.0
  %150 = vmatprep.subr.mxu0 0.0
  %151 = vmatpush1.msra.mxu0 0.0
  %152 = vmatprep.subr.mxu0 0.0
  %153 = vmatpush1.msra.mxu0 0.0
  %154 = vmatprep.subr.mxu0 0.0
  %155 = vmatpush1.msra.mxu0 0.0
  %156 = vmatprep.subr.mxu0 0.0
  %157 = vmatpush1.msra.mxu0 0.0
  %158 = vmatprep.subr.mxu0 0.0
  %159 = vmatpush1.msra.mxu0 0.0
  %160 = vmatprep.subr.mxu0 0.0
  %161 = vmatpush1.msra.mxu0 0.0
  %162 = vmatprep.subr.mxu0 0.0
  %163 = vmatpush1.msra.mxu0 0.0
  %164 = vmatprep.subr.mxu0 0.0
  %165 = vmatpush1.msra.mxu0 0.0
  %166 = vmatprep.subr.mxu0 0.0
  %167 = vmatpush1.msra.mxu0 0.0
  %168 = vmatprep.subr.mxu0 0.0
  %169 = vmatpush1.msra.mxu0 0.0
  %170 = vmatprep.subr.mxu0 0.0
  %171 = vmatpush1.msra.mxu0 0.0
  %172 = vmatprep.subr.mxu0 0.0
  %173 = vmatpush1.msra.mxu0 0.0
  %174 = vmatprep.subr.mxu0 0.0
  %175 = vmatpush1.msra.mxu0 0.0
  %176 = vmatprep.subr.mxu0 0.0
  %177 = vmatpush1.msra.mxu0 0.0
  %178 = vmatprep.subr.mxu0 0.0
  %179 = vmatpush1.msra.mxu0 0.0
  %180 = vmatprep.mubr.f32.mxu0 0.0
  %181 = vmatmul.mubr.f32.gmra.mrb[0].mxu0 %v40
  %v182 = vpop.f32.mrb[0].mxu0
  %v183 = vadd.f32 0.0, %v182
  %v184 = vpop.f32.mrb[0].mxu0
  %185 = vdwg.mxu0
  %v187 = vsel %vm38, %v183, 0
  %189 = vmatprep.subr.mxu0 0.0
  %190 = vmatpush1.msra.mxu0 %v30
  %191 = vmatprep.subr.mxu0 0.0
  %192 = vmatpush1.msra.mxu0 %v31
  %193 = vmatprep.subr.mxu0 0.0
  %194 = vmatpush1.msra.mxu0 %v32
  %195 = vmatprep.subr.mxu0 0.0
  %196 = vmatpush1.msra.mxu0 %v33
  %197 = vmatprep.subr.mxu0 0.0
  %198 = vmatpush1.msra.mxu0 0.0
  %199 = vmatprep.subr.mxu0 0.0
  %200 = vmatpush1.msra.mxu0 0.0
  %201 = vmatprep.subr.mxu0 0.0
  %202 = vmatpush1.msra.mxu0 0.0
  %203 = vmatprep.subr.mxu0 0.0
  %204 = vmatpush1.msra.mxu0 0.0
  %205 = vmatprep.subr.mxu0 0.0
  %206 = vmatpush1.msra.mxu0 0.0
  %207 = vmatprep.subr.mxu0 0.0
  %208 = vmatpush1.msra.mxu0 0.0
  %209 = vmatprep.subr.mxu0 0.0
  %210 = vmatpush1.msra.mxu0 0.0
  %211 = vmatprep.subr.mxu0 0.0
  %212 = vmatpush1.msra.mxu0 0.0
  %213 = vmatprep.subr.mxu0 0.0
  %214 = vmatpush1.msra.mxu0 0.0
  %215 = vmatprep.subr.mxu0 0.0
  %216 = vmatpush1.msra.mxu0 0.0
  %217 = vmatprep.subr.mxu0 0.0
  %218 = vmatpush1.msra.mxu0 0.0
  %219 = vmatprep.subr.mxu0 0.0
  %220 = vmatpush1.msra.mxu0 0.0
  %221 = vmatprep.subr.mxu0 0.0
  %222 = vmatpush1.msra.mxu0 0.0
  %223 = vmatprep.subr.mxu0 0.0
  %224 = vmatpush1.msra.mxu0 0.0
  %225 = vmatprep.subr.mxu0 0.0
  %226 = vmatpush1.msra.mxu0 0.0
  %227 = vmatprep.subr.mxu0 0.0
  %228 = vmatpush1.msra.mxu0 0.0
  %229 = vmatprep.subr.mxu0 0.0
  %230 = vmatpush1.msra.mxu0 0.0
  %231 = vmatprep.subr.mxu0 0.0
  %232 = vmatpush1.msra.mxu0 0.0
  %233 = vmatprep.subr.mxu0 0.0
  %234 = vmatpush1.msra.mxu0 0.0
  %235 = vmatprep.subr.mxu0 0.0
  %236 = vmatpush1.msra.mxu0 0.0
  %237 = vmatprep.subr.mxu0 0.0
  %238 = vmatpush1.msra.mxu0 0.0
  %239 = vmatprep.subr.mxu0 0.0
  %240 = vmatpush1.msra.mxu0 0.0
  %241 = vmatprep.subr.mxu0 0.0
  %242 = vmatpush1.msra.mxu0 0.0
  %243 = vmatprep.subr.mxu0 0.0
  %244 = vmatpush1.msra.mxu0 0.0
  %245 = vmatprep.subr.mxu0 0.0
  %246 = vmatpush1.msra.mxu0 0.0
  %247 = vmatprep.subr.mxu0 0.0
  %248 = vmatpush1.msra.mxu0 0.0
  %249 = vmatprep.subr.mxu0 0.0
  %250 = vmatpush1.msra.mxu0 0.0
  %251 = vmatprep.subr.mxu0 0.0
  %252 = vmatpush1.msra.mxu0 0.0
  %253 = vmatprep.mubr.f32.mxu0 0.0
  %254 = vmatmul.mubr.f32.gmra.mrb[0].mxu0 %v187
  %v255 = vpop.f32.mrb[0].mxu0
  %v256 = vadd.f32 0.0, %v255
  %v257 = vpop.f32.mrb[0].mxu0
  %258 = vdwg.mxu0
  %v260 = vsel %vm38, %v109, 0
  %262 = vmatprep.subr.mxu0 0.0
  %263 = vmatpush1.msra.mxu0 %v26
  %264 = vmatprep.subr.mxu0 0.0
  %265 = vmatpush1.msra.mxu0 %v27
  %266 = vmatprep.subr.mxu0 0.0
  %267 = vmatpush1.msra.mxu0 %v28
  %268 = vmatprep.subr.mxu0 0.0
  %269 = vmatpush1.msra.mxu0 %v29
  %270 = vmatprep.subr.mxu0 0.0
  %271 = vmatpush1.msra.mxu0 0.0
  %272 = vmatprep.subr.mxu0 0.0
  %273 = vmatpush1.msra.mxu0 0.0
  %274 = vmatprep.subr.mxu0 0.0
  %275 = vmatpush1.msra.mxu0 0.0
  %276 = vmatprep.subr.mxu0 0.0
  %277 = vmatpush1.msra.mxu0 0.0
  %278 = vmatprep.subr.mxu0 0.0
  %279 = vmatpush1.msra.mxu0 0.0
  %280 = vmatprep.subr.mxu0 0.0
  %281 = vmatpush1.msra.mxu0 0.0
  %282 = vmatprep.subr.mxu0 0.0
  %283 = vmatpush1.msra.mxu0 0.0
  %284 = vmatprep.subr.mxu0 0.0
  %285 = vmatpush1.msra.mxu0 0.0
  %286 = vmatprep.subr.mxu0 0.0
  %287 = vmatpush1.msra.mxu0 0.0
  %288 = vmatprep.subr.mxu0 0.0
  %289 = vmatpush1.msra.mxu0 0.0
  %290 = vmatprep.subr.mxu0 0.0
  %291 = vmatpush1.msra.mxu0 0.0
  %292 = vmatprep.subr.mxu0 0.0
  %293 = vmatpush1.msra.mxu0 0.0
  %294 = vmatprep.subr.mxu0 0.0
  %295 = vmatpush1.msra.mxu0 0.0
  %296 = vmatprep.subr.mxu0 0.0
  %297 = vmatpush1.msra.mxu0 0.0
  %298 = vmatprep.subr.mxu0 0.0
  %299 = vmatpush1.msra.mxu0 0.0
  %300 = vmatprep.subr.mxu0 0.0
  %301 = vmatpush1.msra.mxu0 0.0
  %302 = vmatprep.subr.mxu0 0.0
  %303 = vmatpush1.msra.mxu0 0.0
  %304 = vmatprep.subr.mxu0 0.0
  %305 = vmatpush1.msra.mxu0 0.0
  %306 = vmatprep.subr.mxu0 0.0
  %307 = vmatpush1.msra.mxu0 0.0
  %308 = vmatprep.subr.mxu0 0.0
  %309 = vmatpush1.msra.mxu0 0.0
  %310 = vmatprep.subr.mxu0 0.0
  %311 = vmatpush1.msra.mxu0 0.0
  %312 = vmatprep.subr.mxu0 0.0
  %313 = vmatpush1.msra.mxu0 0.0
  %314 = vmatprep.subr.mxu0 0.0
  %315 = vmatpush1.msra.mxu0 0.0
  %316 = vmatprep.subr.mxu0 0.0
  %317 = vmatpush1.msra.mxu0 0.0
  %318 = vmatprep.subr.mxu0 0.0
  %319 = vmatpush1.msra.mxu0 0.0
  %320 = vmatprep.subr.mxu0 0.0
  %321 = vmatpush1.msra.mxu0 0.0
  %322 = vmatprep.subr.mxu0 0.0
  %323 = vmatpush1.msra.mxu0 0.0
  %324 = vmatprep.subr.mxu0 0.0
  %325 = vmatpush1.msra.mxu0 0.0
  %326 = vmatprep.mubr.f32.mxu0 0.0
  %327 = vmatmul.mubr.f32.gmra.mrb[0].mxu0 %v260
  %v328 = vpop.f32.mrb[0].mxu0
  %v329 = vadd.f32 %v256, %v328
  %v330 = vpop.f32.mrb[0].mxu0
  %331 = vdwg.mxu0
  %v332 = vld [vmem:[%s5] sm:$0xff]
  %v333 = vadd.f32 %v329, %v332
  %v334 = vlaneseq
  %v335 = vand.u32 %v334, 127
  %vm336 = vcmask 130048
  %v337 = vsel %vm336, %v333, -inf
  %338 = vmax.xlane.f32.xlu0 %v337
  %v339 = vpop.xlane.xlu0 %338
  %vm340 = vcmp.eq.f32.partialorder %v333, %v339
  %v341 = vcvt.s32.f32 %v335
  %v342 = vsel %vm340, %v341, 16.0
  %v343 = vsel %vm336, %v342, inf
  %344 = vmin.xlane.f32.xlu0 %v343
  %v345 = vpop.xlane.xlu0 %344
  %v346 = vcvt.f32.s32.to.zero.pseudo %v345
  %vm347 = vcmp.eq.s32.totalorder %v335, %v346
  %v348 = vsel %vm347, 1, 0
  %v349 = vcvt.s32.f32 %v348
  %vm350 = vcmask 7168
  %351 = vst.msk [vmem:[%s7] sm:$0xff] %vm350, %v346
  %v352 = vsel %vm336, %v329, -inf
  %353 = vmax.xlane.f32.xlu0 %v352
  %v354 = vpop.xlane.xlu0 %353
  %v355 = vsub.f32 %v329, %v354
  %v356 = vmul.f32 %v355, 1.442695
  %v357 = vpow.pop %v356
  %v358 = vsel %vm336, %v357, 0.0
  %359 = vadd.xlane.f32.xlu0 %v358
  %v360 = vpop.xlane.xlu0 %359
  %v361 = vlog2.pop %v360
  %v362 = vmul.f32 %v361, 0.6931472
  %v363 = vadd.f32 %v362, %v354
  %v364 = vrcp.pop %v360
  %v365 = vmul.f32 %v357, %v364
  %v366 = vmul.f32 %v349, %v329
  %v367 = vsel %vm336, %v366, 0.0
  %368 = vadd.xlane.f32.xlu0 %v367
  %v369 = vpop.xlane.xlu0 %368
  %v370 = vsub.f32 %v363, %v369
  %v371 = vrot.slane %v370, 4
  %v372 = vadd.f32 %v370, %v371
  %v373 = vrot.slane %v372, 2
  %v374 = vadd.f32 %v372, %v373
  %v375 = vrot.slane %v374, 1
  %v376 = vadd.f32 %v374, %v375
  %v377 = vmul.f32 %v376, 0.125
  %v378 = vsub.f32 %v365, %v349
  %v379 = vmul.f32 %v378, 0.125
  %380 = vxpose.xlu0.b32.start [1/16] %v109, 128
  %381 = vxpose.xlu0.b32.cont [2/16] 0.0, 128
  %382 = vxpose.xlu0.b32.cont [3/16] 0.0, 128
  %383 = vxpose.xlu0.b32.cont [4/16] 0.0, 128
  %384 = vxpose.xlu0.b32.cont [5/16] 0.0, 128
  %385 = vxpose.xlu0.b32.cont [6/16] 0.0, 128
  %386 = vxpose.xlu0.b32.cont [7/16] 0.0, 128
  %387 = vxpose.xlu0.b32.cont [8/16] 0.0, 128
  %388 = vxpose.xlu0.b32.cont [9/16] 0.0, 128
  %389 = vxpose.xlu0.b32.cont [10/16] 0.0, 128
  %390 = vxpose.xlu0.b32.cont [11/16] 0.0, 128
  %391 = vxpose.xlu0.b32.cont [12/16] 0.0, 128
  %392 = vxpose.xlu0.b32.cont [13/16] 0.0, 128
  %393 = vxpose.xlu0.b32.cont [14/16] 0.0, 128
  %394 = vxpose.xlu0.b32.cont [15/16] 0.0, 128
  %395 = vxpose.xlu0.b32.end [16/16] 0.0, 128
  %v396 = vpop.trf.xlu0
  %v397 = vpop.trf.xlu0
  %v398 = vpop.trf.xlu0
  %v399 = vpop.trf.xlu0
  %v400 = vpop.trf.xlu0
  %v401 = vpop.trf.xlu0
  %v402 = vpop.trf.xlu0
  %v403 = vpop.trf.xlu0
  %v404 = vpop.trf.xlu0
  %v405 = vpop.trf.xlu0
  %v406 = vpop.trf.xlu0
  %v407 = vpop.trf.xlu0
  %v408 = vpop.trf.xlu0
  %v409 = vpop.trf.xlu0
  %v410 = vpop.trf.xlu0
  %v411 = vpop.trf.xlu0
  %vm412 = vcmask 64512
  %v414 = vsel %vm412, %v396, 0
  %v417 = vsel %vm412, %v397, 0
  %v420 = vsel %vm412, %v398, 0
  %v423 = vsel %vm412, %v399, 0
  %425 = vmatprep.subr.mxu0 0.0
  %426 = vmatpush1.msra.mxu0 %v379
  %427 = vmatprep.subr.mxu0 0.0
  %428 = vmatpush1.msra.mxu0 0.0
  %429 = vmatprep.subr.mxu0 0.0
  %430 = vmatpush1.msra.mxu0 0.0
  %431 = vmatprep.subr.mxu0 0.0
  %432 = vmatpush1.msra.mxu0 0.0
  %433 = vmatprep.subr.mxu0 0.0
  %434 = vmatpush1.msra.mxu0 0.0
  %435 = vmatprep.subr.mxu0 0.0
  %436 = vmatpush1.msra.mxu0 0.0
  %437 = vmatprep.subr.mxu0 0.0
  %438 = vmatpush1.msra.mxu0 0.0
  %439 = vmatprep.subr.mxu0 0.0
  %440 = vmatpush1.msra.mxu0 0.0
  %441 = vmatprep.subr.mxu0 0.0
  %442 = vmatpush1.msra.mxu0 0.0
  %443 = vmatprep.subr.mxu0 0.0
  %444 = vmatpush1.msra.mxu0 0.0
  %445 = vmatprep.subr.mxu0 0.0
  %446 = vmatpush1.msra.mxu0 0.0
  %447 = vmatprep.subr.mxu0 0.0
  %448 = vmatpush1.msra.mxu0 0.0
  %449 = vmatprep.subr.mxu0 0.0
  %450 = vmatpush1.msra.mxu0 0.0
  %451 = vmatprep.subr.mxu0 0.0
  %452 = vmatpush1.msra.mxu0 0.0
  %453 = vmatprep.subr.mxu0 0.0
  %454 = vmatpush1.msra.mxu0 0.0
  %455 = vmatprep.subr.mxu0 0.0
  %456 = vmatpush1.msra.mxu0 0.0
  %457 = vmatprep.subr.mxu0 0.0
  %458 = vmatpush1.msra.mxu0 0.0
  %459 = vmatprep.subr.mxu0 0.0
  %460 = vmatpush1.msra.mxu0 0.0
  %461 = vmatprep.subr.mxu0 0.0
  %462 = vmatpush1.msra.mxu0 0.0
  %463 = vmatprep.subr.mxu0 0.0
  %464 = vmatpush1.msra.mxu0 0.0
  %465 = vmatprep.subr.mxu0 0.0
  %466 = vmatpush1.msra.mxu0 0.0
  %467 = vmatprep.subr.mxu0 0.0
  %468 = vmatpush1.msra.mxu0 0.0
  %469 = vmatprep.subr.mxu0 0.0
  %470 = vmatpush1.msra.mxu0 0.0
  %471 = vmatprep.subr.mxu0 0.0
  %472 = vmatpush1.msra.mxu0 0.0
  %473 = vmatprep.subr.mxu0 0.0
  %474 = vmatpush1.msra.mxu0 0.0
  %475 = vmatprep.subr.mxu0 0.0
  %476 = vmatpush1.msra.mxu0 0.0
  %477 = vmatprep.subr.mxu0 0.0
  %478 = vmatpush1.msra.mxu0 0.0
  %479 = vmatprep.subr.mxu0 0.0
  %480 = vmatpush1.msra.mxu0 0.0
  %481 = vmatprep.subr.mxu0 0.0
  %482 = vmatpush1.msra.mxu0 0.0
  %483 = vmatprep.subr.mxu0 0.0
  %484 = vmatpush1.msra.mxu0 0.0
  %485 = vmatprep.subr.mxu0 0.0
  %486 = vmatpush1.msra.mxu0 0.0
  %487 = vmatprep.subr.mxu0 0.0
  %488 = vmatpush1.msra.mxu0 0.0
  %489 = vmatprep.mubr.f32.mxu0 0.0
  %490 = vmatmul.mubr.f32.gmra.mrb[0].mxu0 %v414
  %v491 = vpop.f32.mrb[0].mxu0
  %v492 = vadd.f32 0.0, %v491
  %v493 = vpop.f32.mrb[0].mxu0
  %494 = vmatprep.mubr.f32.mxu0 0.0
  %495 = vmatmul.mubr.f32.gmra.mrb[0].mxu0 %v417
  %v496 = vpop.f32.mrb[0].mxu0
  %v497 = vadd.f32 0.0, %v496
  %v498 = vpop.f32.mrb[0].mxu0
  %499 = vmatprep.mubr.f32.mxu0 0.0
  %500 = vmatmul.mubr.f32.gmra.mrb[0].mxu0 %v420
  %v501 = vpop.f32.mrb[0].mxu0
  %v502 = vadd.f32 0.0, %v501
  %v503 = vpop.f32.mrb[0].mxu0
  %504 = vmatprep.mubr.f32.mxu0 0.0
  %505 = vmatmul.mubr.f32.gmra.mrb[0].mxu0 %v423
  %v506 = vpop.f32.mrb[0].mxu0
  %v507 = vadd.f32 0.0, %v506
  %v508 = vpop.f32.mrb[0].mxu0
  %509 = vdwg.mxu0
  %v511 = vsel %vm336, %v379, 0
  %v514 = vsel %vm336, %v26, 0
  %v517 = vsel %vm336, %v27, 0
  %v520 = vsel %vm336, %v28, 0
  %v523 = vsel %vm336, %v29, 0
  %525 = vmatprep.subr.mxu0 0.0
  %526 = vmatpush1.xpose.msra.mxu0 %v514
  %527 = vmatprep.subr.mxu0 0.0
  %528 = vmatpush1.xpose.msra.mxu0 %v517
  %529 = vmatprep.subr.mxu0 0.0
  %530 = vmatpush1.xpose.msra.mxu0 %v520
  %531 = vmatprep.subr.mxu0 0.0
  %532 = vmatpush1.xpose.msra.mxu0 %v523
  %533 = vmatprep.subr.mxu0 0.0
  %534 = vmatpush1.xpose.msra.mxu0 0.0
  %535 = vmatprep.subr.mxu0 0.0
  %536 = vmatpush1.xpose.msra.mxu0 0.0
  %537 = vmatprep.subr.mxu0 0.0
  %538 = vmatpush1.xpose.msra.mxu0 0.0
  %539 = vmatprep.subr.mxu0 0.0
  %540 = vmatpush1.xpose.msra.mxu0 0.0
  %541 = vmatprep.subr.mxu0 0.0
  %542 = vmatpush1.xpose.msra.mxu0 0.0
  %543 = vmatprep.subr.mxu0 0.0
  %544 = vmatpush1.xpose.msra.mxu0 0.0
  %545 = vmatprep.subr.mxu0 0.0
  %546 = vmatpush1.xpose.msra.mxu0 0.0
  %547 = vmatprep.subr.mxu0 0.0
  %548 = vmatpush1.xpose.msra.mxu0 0.0
  %549 = vmatprep.subr.mxu0 0.0
  %550 = vmatpush1.xpose.msra.mxu0 0.0
  %551 = vmatprep.subr.mxu0 0.0
  %552 = vmatpush1.xpose.msra.mxu0 0.0
  %553 = vmatprep.subr.mxu0 0.0
  %554 = vmatpush1.xpose.msra.mxu0 0.0
  %555 = vmatprep.subr.mxu0 0.0
  %556 = vmatpush1.xpose.msra.mxu0 0.0
  %557 = vmatprep.subr.mxu0 0.0
  %558 = vmatpush1.xpose.msra.mxu0 0.0
  %559 = vmatprep.subr.mxu0 0.0
  %560 = vmatpush1.xpose.msra.mxu0 0.0
  %561 = vmatprep.subr.mxu0 0.0
  %562 = vmatpush1.xpose.msra.mxu0 0.0
  %563 = vmatprep.subr.mxu0 0.0
  %564 = vmatpush1.xpose.msra.mxu0 0.0
  %565 = vmatprep.subr.mxu0 0.0
  %566 = vmatpush1.xpose.msra.mxu0 0.0
  %567 = vmatprep.subr.mxu0 0.0
  %568 = vmatpush1.xpose.msra.mxu0 0.0
  %569 = vmatprep.subr.mxu0 0.0
  %570 = vmatpush1.xpose.msra.mxu0 0.0
  %571 = vmatprep.subr.mxu0 0.0
  %572 = vmatpush1.xpose.msra.mxu0 0.0
  %573 = vmatprep.subr.mxu0 0.0
  %574 = vmatpush1.xpose.msra.mxu0 0.0
  %575 = vmatprep.subr.mxu0 0.0
  %576 = vmatpush1.xpose.msra.mxu0 0.0
  %577 = vmatprep.subr.mxu0 0.0
  %578 = vmatpush1.xpose.msra.mxu0 0.0
  %579 = vmatprep.subr.mxu0 0.0
  %580 = vmatpush1.xpose.msra.mxu0 0.0
  %581 = vmatprep.subr.mxu0 0.0
  %582 = vmatpush1.xpose.msra.mxu0 0.0
  %583 = vmatprep.subr.mxu0 0.0
  %584 = vmatpush1.xpose.msra.mxu0 0.0
  %585 = vmatprep.subr.mxu0 0.0
  %586 = vmatpush1.xpose.msra.mxu0 0.0
  %587 = vmatprep.subr.mxu0 0.0
  %588 = vmatpush1.xpose.msra.mxu0 0.0
  %589 = vmatprep.mubr.f32.mxu0 0.0
  %590 = vmatmul.mubr.f32.gmra.mrb[0].mxu0 %v511
  %v591 = vpop.f32.mrb[0].mxu0
  %v592 = vadd.f32 0.0, %v591
  %v593 = vpop.f32.mrb[0].mxu0
  %594 = vdwg.mxu0
  %595 = vxpose.xlu0.b32.start [1/16] %v25, 128
  %596 = vxpose.xlu0.b32.cont [2/16] 0.0, 128
  %597 = vxpose.xlu0.b32.cont [3/16] 0.0, 128
  %598 = vxpose.xlu0.b32.cont [4/16] 0.0, 128
  %599 = vxpose.xlu0.b32.cont [5/16] 0.0, 128
  %600 = vxpose.xlu0.b32.cont [6/16] 0.0, 128
  %601 = vxpose.xlu0.b32.cont [7/16] 0.0, 128
  %602 = vxpose.xlu0.b32.cont [8/16] 0.0, 128
  %603 = vxpose.xlu0.b32.cont [9/16] 0.0, 128
  %604 = vxpose.xlu0.b32.cont [10/16] 0.0, 128
  %605 = vxpose.xlu0.b32.cont [11/16] 0.0, 128
  %606 = vxpose.xlu0.b32.cont [12/16] 0.0, 128
  %607 = vxpose.xlu0.b32.cont [13/16] 0.0, 128
  %608 = vxpose.xlu0.b32.cont [14/16] 0.0, 128
  %609 = vxpose.xlu0.b32.cont [15/16] 0.0, 128
  %610 = vxpose.xlu0.b32.end [16/16] 0.0, 128
  %v611 = vpop.trf.xlu0
  %v612 = vpop.trf.xlu0
  %v613 = vpop.trf.xlu0
  %v614 = vpop.trf.xlu0
  %v615 = vpop.trf.xlu0
  %v616 = vpop.trf.xlu0
  %v617 = vpop.trf.xlu0
  %v618 = vpop.trf.xlu0
  %v619 = vpop.trf.xlu0
  %v620 = vpop.trf.xlu0
  %v621 = vpop.trf.xlu0
  %v622 = vpop.trf.xlu0
  %v623 = vpop.trf.xlu0
  %v624 = vpop.trf.xlu0
  %v625 = vpop.trf.xlu0
  %v626 = vpop.trf.xlu0
  %v628 = vsel %vm412, %v611, 0
  %v631 = vsel %vm412, %v612, 0
  %v634 = vsel %vm412, %v613, 0
  %v637 = vsel %vm412, %v614, 0
  %639 = vmatprep.subr.mxu0 0.0
  %640 = vmatpush1.msra.mxu0 %v592
  %641 = vmatprep.subr.mxu0 0.0
  %642 = vmatpush1.msra.mxu0 0.0
  %643 = vmatprep.subr.mxu0 0.0
  %644 = vmatpush1.msra.mxu0 0.0
  %645 = vmatprep.subr.mxu0 0.0
  %646 = vmatpush1.msra.mxu0 0.0
  %647 = vmatprep.subr.mxu0 0.0
  %648 = vmatpush1.msra.mxu0 0.0
  %649 = vmatprep.subr.mxu0 0.0
  %650 = vmatpush1.msra.mxu0 0.0
  %651 = vmatprep.subr.mxu0 0.0
  %652 = vmatpush1.msra.mxu0 0.0
  %653 = vmatprep.subr.mxu0 0.0
  %654 = vmatpush1.msra.mxu0 0.0
  %655 = vmatprep.subr.mxu0 0.0
  %656 = vmatpush1.msra.mxu0 0.0
  %657 = vmatprep.subr.mxu0 0.0
  %658 = vmatpush1.msra.mxu0 0.0
  %659 = vmatprep.subr.mxu0 0.0
  %660 = vmatpush1.msra.mxu0 0.0
  %661 = vmatprep.subr.mxu0 0.0
  %662 = vmatpush1.msra.mxu0 0.0
  %663 = vmatprep.subr.mxu0 0.0
  %664 = vmatpush1.msra.mxu0 0.0
  %665 = vmatprep.subr.mxu0 0.0
  %666 = vmatpush1.msra.mxu0 0.0
  %667 = vmatprep.subr.mxu0 0.0
  %668 = vmatpush1.msra.mxu0 0.0
  %669 = vmatprep.subr.mxu0 0.0
  %670 = vmatpush1.msra.mxu0 0.0
  %671 = vmatprep.subr.mxu0 0.0
  %672 = vmatpush1.msra.mxu0 0.0
  %673 = vmatprep.subr.mxu0 0.0
  %674 = vmatpush1.msra.mxu0 0.0
  %675 = vmatprep.subr.mxu0 0.0
  %676 = vmatpush1.msra.mxu0 0.0
  %677 = vmatprep.subr.mxu0 0.0
  %678 = vmatpush1.msra.mxu0 0.0
  %679 = vmatprep.subr.mxu0 0.0
  %680 = vmatpush1.msra.mxu0 0.0
  %681 = vmatprep.subr.mxu0 0.0
  %682 = vmatpush1.msra.mxu0 0.0
  %683 = vmatprep.subr.mxu0 0.0
  %684 = vmatpush1.msra.mxu0 0.0
  %685 = vmatprep.subr.mxu0 0.0
  %686 = vmatpush1.msra.mxu0 0.0
  %687 = vmatprep.subr.mxu0 0.0
  %688 = vmatpush1.msra.mxu0 0.0
  %689 = vmatprep.subr.mxu0 0.0
  %690 = vmatpush1.msra.mxu0 0.0
  %691 = vmatprep.subr.mxu0 0.0
  %692 = vmatpush1.msra.mxu0 0.0
  %693 = vmatprep.subr.mxu0 0.0
  %694 = vmatpush1.msra.mxu0 0.0
  %695 = vmatprep.subr.mxu0 0.0
  %696 = vmatpush1.msra.mxu0 0.0
  %697 = vmatprep.subr.mxu0 0.0
  %698 = vmatpush1.msra.mxu0 0.0
  %699 = vmatprep.subr.mxu0 0.0
  %700 = vmatpush1.msra.mxu0 0.0
  %701 = vmatprep.subr.mxu0 0.0
  %702 = vmatpush1.msra.mxu0 0.0
  %703 = vmatprep.mubr.f32.mxu0 0.0
  %704 = vmatmul.mubr.f32.gmra.mrb[0].mxu0 %v628
  %v705 = vpop.f32.mrb[0].mxu0
  %v706 = vadd.f32 0.0, %v705
  %v707 = vpop.f32.mrb[0].mxu0
  %708 = vmatprep.mubr.f32.mxu0 0.0
  %709 = vmatmul.mubr.f32.gmra.mrb[0].mxu0 %v631
  %v710 = vpop.f32.mrb[0].mxu0
  %v711 = vadd.f32 0.0, %v710
  %v712 = vpop.f32.mrb[0].mxu0
  %713 = vmatprep.mubr.f32.mxu0 0.0
  %714 = vmatmul.mubr.f32.gmra.mrb[0].mxu0 %v634
  %v715 = vpop.f32.mrb[0].mxu0
  %v716 = vadd.f32 0.0, %v715
  %v717 = vpop.f32.mrb[0].mxu0
  %718 = vmatprep.mubr.f32.mxu0 0.0
  %719 = vmatmul.mubr.f32.gmra.mrb[0].mxu0 %v637
  %v720 = vpop.f32.mrb[0].mxu0
  %v721 = vadd.f32 0.0, %v720
  %v722 = vpop.f32.mrb[0].mxu0
  %723 = vdwg.mxu0
  %v724 = vmul.f32 %v706, %v706
  %v725 = vmul.f32 %v711, %v711
  %v726 = vmul.f32 %v716, %v716
  %v727 = vmul.f32 %v721, %v721
  %v728 = vsel %vm38, %v724, 0.0
  %729 = vadd.xlane.f32.xlu0 %v728
  %v730 = vpop.xlane.xlu0 %729
  %v731 = vsel %vm38, %v725, 0.0
  %732 = vadd.xlane.f32.xlu0 %v731
  %v733 = vpop.xlane.xlu0 %732
  %v734 = vsel %vm38, %v726, 0.0
  %735 = vadd.xlane.f32.xlu0 %v734
  %v736 = vpop.xlane.xlu0 %735
  %v737 = vsel %vm38, %v727, 0.0
  %738 = vadd.xlane.f32.xlu0 %v737
  %v739 = vpop.xlane.xlu0 %738
  %v740 = vadd.f32 %v730, %v733
  %v741 = vadd.f32 %v740, %v736
  %v742 = vadd.f32 %v741, %v739
  %v743 = vrot.slane %v742, 4
  %v744 = vadd.f32 %v742, %v743
  %v745 = vrot.slane %v744, 2
  %v746 = vadd.f32 %v744, %v745
  %v747 = vrot.slane %v746, 1
  %v748 = vadd.f32 %v746, %v747
  %v749 = vmul.f32 %v492, %v492
  %v750 = vmul.f32 %v497, %v497
  %v751 = vmul.f32 %v502, %v502
  %v752 = vmul.f32 %v507, %v507
  %v753 = vsel %vm336, %v749, 0.0
  %754 = vadd.xlane.f32.xlu0 %v753
  %v755 = vpop.xlane.xlu0 %754
  %v756 = vsel %vm336, %v750, 0.0
  %757 = vadd.xlane.f32.xlu0 %v756
  %v758 = vpop.xlane.xlu0 %757
  %v759 = vsel %vm336, %v751, 0.0
  %760 = vadd.xlane.f32.xlu0 %v759
  %v761 = vpop.xlane.xlu0 %760
  %v762 = vsel %vm336, %v752, 0.0
  %763 = vadd.xlane.f32.xlu0 %v762
  %v764 = vpop.xlane.xlu0 %763
  %v765 = vadd.f32 %v755, %v758
  %v766 = vadd.f32 %v765, %v761
  %v767 = vadd.f32 %v766, %v764
  %v768 = vrot.slane %v767, 4
  %v769 = vadd.f32 %v767, %v768
  %v770 = vrot.slane %v769, 2
  %v771 = vadd.f32 %v769, %v770
  %v772 = vrot.slane %v771, 1
  %v773 = vadd.f32 %v771, %v772
  %774 = vxpose.xlu0.b32.start [1/16] %v183, 128
  %775 = vxpose.xlu0.b32.cont [2/16] 0.0, 128
  %776 = vxpose.xlu0.b32.cont [3/16] 0.0, 128
  %777 = vxpose.xlu0.b32.cont [4/16] 0.0, 128
  %778 = vxpose.xlu0.b32.cont [5/16] 0.0, 128
  %779 = vxpose.xlu0.b32.cont [6/16] 0.0, 128
  %780 = vxpose.xlu0.b32.cont [7/16] 0.0, 128
  %781 = vxpose.xlu0.b32.cont [8/16] 0.0, 128
  %782 = vxpose.xlu0.b32.cont [9/16] 0.0, 128
  %783 = vxpose.xlu0.b32.cont [10/16] 0.0, 128
  %784 = vxpose.xlu0.b32.cont [11/16] 0.0, 128
  %785 = vxpose.xlu0.b32.cont [12/16] 0.0, 128
  %786 = vxpose.xlu0.b32.cont [13/16] 0.0, 128
  %787 = vxpose.xlu0.b32.cont [14/16] 0.0, 128
  %788 = vxpose.xlu0.b32.cont [15/16] 0.0, 128
  %789 = vxpose.xlu0.b32.end [16/16] 0.0, 128
  %v790 = vpop.trf.xlu0
  %v791 = vpop.trf.xlu0
  %v792 = vpop.trf.xlu0
  %v793 = vpop.trf.xlu0
  %v794 = vpop.trf.xlu0
  %v795 = vpop.trf.xlu0
  %v796 = vpop.trf.xlu0
  %v797 = vpop.trf.xlu0
  %v798 = vpop.trf.xlu0
  %v799 = vpop.trf.xlu0
  %v800 = vpop.trf.xlu0
  %v801 = vpop.trf.xlu0
  %v802 = vpop.trf.xlu0
  %v803 = vpop.trf.xlu0
  %v804 = vpop.trf.xlu0
  %v805 = vpop.trf.xlu0
  %v807 = vsel %vm412, %v790, 0
  %v810 = vsel %vm412, %v791, 0
  %v813 = vsel %vm412, %v792, 0
  %v816 = vsel %vm412, %v793, 0
  %818 = vmatprep.subr.mxu0 0.0
  %819 = vmatpush1.msra.mxu0 %v379
  %820 = vmatprep.subr.mxu0 0.0
  %821 = vmatpush1.msra.mxu0 0.0
  %822 = vmatprep.subr.mxu0 0.0
  %823 = vmatpush1.msra.mxu0 0.0
  %824 = vmatprep.subr.mxu0 0.0
  %825 = vmatpush1.msra.mxu0 0.0
  %826 = vmatprep.subr.mxu0 0.0
  %827 = vmatpush1.msra.mxu0 0.0
  %828 = vmatprep.subr.mxu0 0.0
  %829 = vmatpush1.msra.mxu0 0.0
  %830 = vmatprep.subr.mxu0 0.0
  %831 = vmatpush1.msra.mxu0 0.0
  %832 = vmatprep.subr.mxu0 0.0
  %833 = vmatpush1.msra.mxu0 0.0
  %834 = vmatprep.subr.mxu0 0.0
  %835 = vmatpush1.msra.mxu0 0.0
  %836 = vmatprep.subr.mxu0 0.0
  %837 = vmatpush1.msra.mxu0 0.0
  %838 = vmatprep.subr.mxu0 0.0
  %839 = vmatpush1.msra.mxu0 0.0
  %840 = vmatprep.subr.mxu0 0.0
  %841 = vmatpush1.msra.mxu0 0.0
  %842 = vmatprep.subr.mxu0 0.0
  %843 = vmatpush1.msra.mxu0 0.0
  %844 = vmatprep.subr.mxu0 0.0
  %845 = vmatpush1.msra.mxu0 0.0
  %846 = vmatprep.subr.mxu0 0.0
  %847 = vmatpush1.msra.mxu0 0.0
  %848 = vmatprep.subr.mxu0 0.0
  %849 = vmatpush1.msra.mxu0 0.0
  %850 = vmatprep.subr.mxu0 0.0
  %851 = vmatpush1.msra.mxu0 0.0
  %852 = vmatprep.subr.mxu0 0.0
  %853 = vmatpush1.msra.mxu0 0.0
  %854 = vmatprep.subr.mxu0 0.0
  %855 = vmatpush1.msra.mxu0 0.0
  %856 = vmatprep.subr.mxu0 0.0
  %857 = vmatpush1.msra.mxu0 0.0
  %858 = vmatprep.subr.mxu0 0.0
  %859 = vmatpush1.msra.mxu0 0.0
  %860 = vmatprep.subr.mxu0 0.0
  %861 = vmatpush1.msra.mxu0 0.0
  %862 = vmatprep.subr.mxu0 0.0
  %863 = vmatpush1.msra.mxu0 0.0
  %864 = vmatprep.subr.mxu0 0.0
  %865 = vmatpush1.msra.mxu0 0.0
  %866 = vmatprep.subr.mxu0 0.0
  %867 = vmatpush1.msra.mxu0 0.0
  %868 = vmatprep.subr.mxu0 0.0
  %869 = vmatpush1.msra.mxu0 0.0
  %870 = vmatprep.subr.mxu0 0.0
  %871 = vmatpush1.msra.mxu0 0.0
  %872 = vmatprep.subr.mxu0 0.0
  %873 = vmatpush1.msra.mxu0 0.0
  %874 = vmatprep.subr.mxu0 0.0
  %875 = vmatpush1.msra.mxu0 0.0
  %876 = vmatprep.subr.mxu0 0.0
  %877 = vmatpush1.msra.mxu0 0.0
  %878 = vmatprep.subr.mxu0 0.0
  %879 = vmatpush1.msra.mxu0 0.0
  %880 = vmatprep.subr.mxu0 0.0
  %881 = vmatpush1.msra.mxu0 0.0
  %882 = vmatprep.mubr.f32.mxu0 0.0
  %883 = vmatmul.mubr.f32.gmra.mrb[0].mxu0 %v807
  %v884 = vpop.f32.mrb[0].mxu0
  %v885 = vadd.f32 0.0, %v884
  %v886 = vpop.f32.mrb[0].mxu0
  %887 = vmatprep.mubr.f32.mxu0 0.0
  %888 = vmatmul.mubr.f32.gmra.mrb[0].mxu0 %v810
  %v889 = vpop.f32.mrb[0].mxu0
  %v890 = vadd.f32 0.0, %v889
  %v891 = vpop.f32.mrb[0].mxu0
  %892 = vmatprep.mubr.f32.mxu0 0.0
  %893 = vmatmul.mubr.f32.gmra.mrb[0].mxu0 %v813
  %v894 = vpop.f32.mrb[0].mxu0
  %v895 = vadd.f32 0.0, %v894
  %v896 = vpop.f32.mrb[0].mxu0
  %897 = vmatprep.mubr.f32.mxu0 0.0
  %898 = vmatmul.mubr.f32.gmra.mrb[0].mxu0 %v816
  %v899 = vpop.f32.mrb[0].mxu0
  %v900 = vadd.f32 0.0, %v899
  %v901 = vpop.f32.mrb[0].mxu0
  %902 = vdwg.mxu0
  %v904 = vsel %vm336, %v30, 0
  %v907 = vsel %vm336, %v31, 0
  %v910 = vsel %vm336, %v32, 0
  %v913 = vsel %vm336, %v33, 0
  %915 = vmatprep.subr.mxu0 0.0
  %916 = vmatpush1.xpose.msra.mxu0 %v904
  %917 = vmatprep.subr.mxu0 0.0
  %918 = vmatpush1.xpose.msra.mxu0 %v907
  %919 = vmatprep.subr.mxu0 0.0
  %920 = vmatpush1.xpose.msra.mxu0 %v910
  %921 = vmatprep.subr.mxu0 0.0
  %922 = vmatpush1.xpose.msra.mxu0 %v913
  %923 = vmatprep.subr.mxu0 0.0
  %924 = vmatpush1.xpose.msra.mxu0 0.0
  %925 = vmatprep.subr.mxu0 0.0
  %926 = vmatpush1.xpose.msra.mxu0 0.0
  %927 = vmatprep.subr.mxu0 0.0
  %928 = vmatpush1.xpose.msra.mxu0 0.0
  %929 = vmatprep.subr.mxu0 0.0
  %930 = vmatpush1.xpose.msra.mxu0 0.0
  %931 = vmatprep.subr.mxu0 0.0
  %932 = vmatpush1.xpose.msra.mxu0 0.0
  %933 = vmatprep.subr.mxu0 0.0
  %934 = vmatpush1.xpose.msra.mxu0 0.0
  %935 = vmatprep.subr.mxu0 0.0
  %936 = vmatpush1.xpose.msra.mxu0 0.0
  %937 = vmatprep.subr.mxu0 0.0
  %938 = vmatpush1.xpose.msra.mxu0 0.0
  %939 = vmatprep.subr.mxu0 0.0
  %940 = vmatpush1.xpose.msra.mxu0 0.0
  %941 = vmatprep.subr.mxu0 0.0
  %942 = vmatpush1.xpose.msra.mxu0 0.0
  %943 = vmatprep.subr.mxu0 0.0
  %944 = vmatpush1.xpose.msra.mxu0 0.0
  %945 = vmatprep.subr.mxu0 0.0
  %946 = vmatpush1.xpose.msra.mxu0 0.0
  %947 = vmatprep.subr.mxu0 0.0
  %948 = vmatpush1.xpose.msra.mxu0 0.0
  %949 = vmatprep.subr.mxu0 0.0
  %950 = vmatpush1.xpose.msra.mxu0 0.0
  %951 = vmatprep.subr.mxu0 0.0
  %952 = vmatpush1.xpose.msra.mxu0 0.0
  %953 = vmatprep.subr.mxu0 0.0
  %954 = vmatpush1.xpose.msra.mxu0 0.0
  %955 = vmatprep.subr.mxu0 0.0
  %956 = vmatpush1.xpose.msra.mxu0 0.0
  %957 = vmatprep.subr.mxu0 0.0
  %958 = vmatpush1.xpose.msra.mxu0 0.0
  %959 = vmatprep.subr.mxu0 0.0
  %960 = vmatpush1.xpose.msra.mxu0 0.0
  %961 = vmatprep.subr.mxu0 0.0
  %962 = vmatpush1.xpose.msra.mxu0 0.0
  %963 = vmatprep.subr.mxu0 0.0
  %964 = vmatpush1.xpose.msra.mxu0 0.0
  %965 = vmatprep.subr.mxu0 0.0
  %966 = vmatpush1.xpose.msra.mxu0 0.0
  %967 = vmatprep.subr.mxu0 0.0
  %968 = vmatpush1.xpose.msra.mxu0 0.0
  %969 = vmatprep.subr.mxu0 0.0
  %970 = vmatpush1.xpose.msra.mxu0 0.0
  %971 = vmatprep.subr.mxu0 0.0
  %972 = vmatpush1.xpose.msra.mxu0 0.0
  %973 = vmatprep.subr.mxu0 0.0
  %974 = vmatpush1.xpose.msra.mxu0 0.0
  %975 = vmatprep.subr.mxu0 0.0
  %976 = vmatpush1.xpose.msra.mxu0 0.0
  %977 = vmatprep.subr.mxu0 0.0
  %978 = vmatpush1.xpose.msra.mxu0 0.0
  %979 = vmatprep.mubr.f32.mxu0 0.0
  %980 = vmatmul.mubr.f32.gmra.mrb[0].mxu0 %v511
  %v981 = vpop.f32.mrb[0].mxu0
  %v982 = vadd.f32 0.0, %v981
  %v983 = vpop.f32.mrb[0].mxu0
  %984 = vdwg.mxu0
  %985 = vmatprep.subr.mxu0 0.0
  %986 = vmatpush1.msra.mxu0 %v982
  %987 = vmatprep.subr.mxu0 0.0
  %988 = vmatpush1.msra.mxu0 0.0
  %989 = vmatprep.subr.mxu0 0.0
  %990 = vmatpush1.msra.mxu0 0.0
  %991 = vmatprep.subr.mxu0 0.0
  %992 = vmatpush1.msra.mxu0 0.0
  %993 = vmatprep.subr.mxu0 0.0
  %994 = vmatpush1.msra.mxu0 0.0
  %995 = vmatprep.subr.mxu0 0.0
  %996 = vmatpush1.msra.mxu0 0.0
  %997 = vmatprep.subr.mxu0 0.0
  %998 = vmatpush1.msra.mxu0 0.0
  %999 = vmatprep.subr.mxu0 0.0
  %1000 = vmatpush1.msra.mxu0 0.0
  %1001 = vmatprep.subr.mxu0 0.0
  %1002 = vmatpush1.msra.mxu0 0.0
  %1003 = vmatprep.subr.mxu0 0.0
  %1004 = vmatpush1.msra.mxu0 0.0
  %1005 = vmatprep.subr.mxu0 0.0
  %1006 = vmatpush1.msra.mxu0 0.0
  %1007 = vmatprep.subr.mxu0 0.0
  %1008 = vmatpush1.msra.mxu0 0.0
  %1009 = vmatprep.subr.mxu0 0.0
  %1010 = vmatpush1.msra.mxu0 0.0
  %1011 = vmatprep.subr.mxu0 0.0
  %1012 = vmatpush1.msra.mxu0 0.0
  %1013 = vmatprep.subr.mxu0 0.0
  %1014 = vmatpush1.msra.mxu0 0.0
  %1015 = vmatprep.subr.mxu0 0.0
  %1016 = vmatpush1.msra.mxu0 0.0
  %1017 = vmatprep.subr.mxu0 0.0
  %1018 = vmatpush1.msra.mxu0 0.0
  %1019 = vmatprep.subr.mxu0 0.0
  %1020 = vmatpush1.msra.mxu0 0.0
  %1021 = vmatprep.subr.mxu0 0.0
  %1022 = vmatpush1.msra.mxu0 0.0
  %1023 = vmatprep.subr.mxu0 0.0
  %1024 = vmatpush1.msra.mxu0 0.0
  %1025 = vmatprep.subr.mxu0 0.0
  %1026 = vmatpush1.msra.mxu0 0.0
  %1027 = vmatprep.subr.mxu0 0.0
  %1028 = vmatpush1.msra.mxu0 0.0
  %1029 = vmatprep.subr.mxu0 0.0
  %1030 = vmatpush1.msra.mxu0 0.0
  %1031 = vmatprep.subr.mxu0 0.0
  %1032 = vmatpush1.msra.mxu0 0.0
  %1033 = vmatprep.subr.mxu0 0.0
  %1034 = vmatpush1.msra.mxu0 0.0
  %1035 = vmatprep.subr.mxu0 0.0
  %1036 = vmatpush1.msra.mxu0 0.0
  %1037 = vmatprep.subr.mxu0 0.0
  %1038 = vmatpush1.msra.mxu0 0.0
  %1039 = vmatprep.subr.mxu0 0.0
  %1040 = vmatpush1.msra.mxu0 0.0
  %1041 = vmatprep.subr.mxu0 0.0
  %1042 = vmatpush1.msra.mxu0 0.0
  %1043 = vmatprep.subr.mxu0 0.0
  %1044 = vmatpush1.msra.mxu0 0.0
  %1045 = vmatprep.subr.mxu0 0.0
  %1046 = vmatpush1.msra.mxu0 0.0
  %1047 = vmatprep.subr.mxu0 0.0
  %1048 = vmatpush1.msra.mxu0 0.0
  %1049 = vmatprep.mubr.f32.mxu0 0.0
  %1050 = vmatmul.mubr.f32.gmra.mrb[0].mxu0 %v628
  %v1051 = vpop.f32.mrb[0].mxu0
  %v1052 = vadd.f32 0.0, %v1051
  %v1053 = vpop.f32.mrb[0].mxu0
  %1054 = vmatprep.mubr.f32.mxu0 0.0
  %1055 = vmatmul.mubr.f32.gmra.mrb[0].mxu0 %v631
  %v1056 = vpop.f32.mrb[0].mxu0
  %v1057 = vadd.f32 0.0, %v1056
  %v1058 = vpop.f32.mrb[0].mxu0
  %1059 = vmatprep.mubr.f32.mxu0 0.0
  %1060 = vmatmul.mubr.f32.gmra.mrb[0].mxu0 %v634
  %v1061 = vpop.f32.mrb[0].mxu0
  %v1062 = vadd.f32 0.0, %v1061
  %v1063 = vpop.f32.mrb[0].mxu0
  %1064 = vmatprep.mubr.f32.mxu0 0.0
  %1065 = vmatmul.mubr.f32.gmra.mrb[0].mxu0 %v637
  %v1066 = vpop.f32.mrb[0].mxu0
  %v1067 = vadd.f32 0.0, %v1066
  %v1068 = vpop.f32.mrb[0].mxu0
  %1069 = vdwg.mxu0
  %v1070 = vmul.f32 %v1052, %v1052
  %v1071 = vmul.f32 %v1057, %v1057
  %v1072 = vmul.f32 %v1062, %v1062
  %v1073 = vmul.f32 %v1067, %v1067
  %v1074 = vsel %vm38, %v1070, 0.0
  %1075 = vadd.xlane.f32.xlu0 %v1074
  %v1076 = vpop.xlane.xlu0 %1075
  %v1077 = vsel %vm38, %v1071, 0.0
  %1078 = vadd.xlane.f32.xlu0 %v1077
  %v1079 = vpop.xlane.xlu0 %1078
  %v1080 = vsel %vm38, %v1072, 0.0
  %1081 = vadd.xlane.f32.xlu0 %v1080
  %v1082 = vpop.xlane.xlu0 %1081
  %v1083 = vsel %vm38, %v1073, 0.0
  %1084 = vadd.xlane.f32.xlu0 %v1083
  %v1085 = vpop.xlane.xlu0 %1084
  %v1086 = vadd.f32 %v1076, %v1079
  %v1087 = vadd.f32 %v1086, %v1082
  %v1088 = vadd.f32 %v1087, %v1085
  %v1089 = vrot.slane %v1088, 4
  %v1090 = vadd.f32 %v1088, %v1089
  %v1091 = vrot.slane %v1090, 2
  %v1092 = vadd.f32 %v1090, %v1091
  %v1093 = vrot.slane %v1092, 1
  %v1094 = vadd.f32 %v1092, %v1093
  %v1095 = vmul.f32 %v885, %v885
  %v1096 = vmul.f32 %v890, %v890
  %v1097 = vmul.f32 %v895, %v895
  %v1098 = vmul.f32 %v900, %v900
  %v1099 = vsel %vm336, %v1095, 0.0
  %1100 = vadd.xlane.f32.xlu0 %v1099
  %v1101 = vpop.xlane.xlu0 %1100
  %v1102 = vsel %vm336, %v1096, 0.0
  %1103 = vadd.xlane.f32.xlu0 %v1102
  %v1104 = vpop.xlane.xlu0 %1103
  %v1105 = vsel %vm336, %v1097, 0.0
  %1106 = vadd.xlane.f32.xlu0 %v1105
  %v1107 = vpop.xlane.xlu0 %1106
  %v1108 = vsel %vm336, %v1098, 0.0
  %1109 = vadd.xlane.f32.xlu0 %v1108
  %v1110 = vpop.xlane.xlu0 %1109
  %v1111 = vadd.f32 %v1101, %v1104
  %v1112 = vadd.f32 %v1111, %v1107
  %v1113 = vadd.f32 %v1112, %v1110
  %v1114 = vrot.slane %v1113, 4
  %v1115 = vadd.f32 %v1113, %v1114
  %v1116 = vrot.slane %v1115, 2
  %v1117 = vadd.f32 %v1115, %v1116
  %v1118 = vrot.slane %v1117, 1
  %v1119 = vadd.f32 %v1117, %v1118
  %v1120 = vadd.f32 %v748, %v773
  %v1121 = vadd.f32 %v1094, %v1119
  %v1122 = vadd.f32 %v1121, 1.1920929e-07
  %v1123 = vrcp.pop %v1122
  %v1124 = vmul.f32 %v1120, %v1123
  %v1125 = vadd.f32 %v1120, 1.1920929e-07
  %v1126 = vrcp.pop %v1125
  %v1127 = vmul.f32 %v1121, %v1126
  %v1128 = vadd.f32 %v1124, %v1127
  %v1129 = vmul.f32 %v1128, 0.5
  %v1130 = vadd.f32 %v1120, %v1121
  %vm1131 = vcmp.eq.s32.totalorder %v335, 0
  %v1132 = vsel %vm1131, %v377, 0.0
  %vm1133 = vcmp.eq.s32.totalorder %v335, 1
  %v1134 = vsel %vm1133, %v748, 0.0
  %v1135 = vadd.f32 %v1132, %v1134
  %vm1136 = vcmp.eq.s32.totalorder %v335, 2
  %v1137 = vsel %vm1136, %v773, 0.0
  %v1138 = vadd.f32 %v1135, %v1137
  %vm1139 = vcmp.eq.s32.totalorder %v335, 3
  %v1140 = vsel %vm1139, %v1094, 0.0
  %v1141 = vadd.f32 %v1138, %v1140
  %vm1142 = vcmp.eq.s32.totalorder %v335, 4
  %v1143 = vsel %vm1142, %v1119, 0.0
  %v1144 = vadd.f32 %v1141, %v1143
  %vm1145 = vcmp.eq.s32.totalorder %v335, 5
  %v1146 = vsel %vm1145, %v1129, 0.0
  %v1147 = vadd.f32 %v1144, %v1146
  %vm1148 = vcmp.eq.s32.totalorder %v335, 6
  %v1149 = vsel %vm1148, %v1130, 0.0
  %v1150 = vadd.f32 %v1147, %v1149
  %1151 = vst [vmem:[%s6] sm:$0x1] %v1150
  // Predicated region
  $region26: #{balance_penalty.1} parent=0 // pred_check
    _
  $region27: #{balance_penalty.1} parent=0 // pred_check_branch
    %1153 = sbr.rel (0) target = $region29
  $region28: #{balance_penalty.1} parent=0 // pred_region
    _
  $region29: #{balance_penalty.1} parent=0 // pred_fallthru
    _
  // Predicated region
  $region30: #{balance_penalty.1} parent=0 // pred_check
    _
  $region31: #{balance_penalty.1} parent=0 // pred_check_branch
    %1155 = sbr.rel (0) target = $region33
  $region32: #{balance_penalty.1} parent=0 // pred_region
    _
  $region33: #{balance_penalty.1} parent=0 // pred_fallthru
    _
  // Predicated region
  $region34: #{balance_penalty.1} parent=0 // pred_check
    _
  $region35: #{balance_penalty.1} parent=0 // pred_check_branch
    %1157 = sbr.rel (0) target = $region37
  $region36: #{balance_penalty.1} parent=0 // pred_region
    _
  $region37: #{balance_penalty.1} parent=0 // pred_fallthru
    _
  // Predicated region
  $region38: #{balance_penalty.1} parent=0 // pred_check
    _
  $region39: #{balance_penalty.1} parent=0 // pred_check_branch
    %1159 = sbr.rel (0) target = $region41
  $region40: #{balance_penalty.1} parent=0 // pred_region
    _
  $region41: #{balance_penalty.1} parent=0 // pred_fallthru
    _

</llo_original>
